<compile_context>
chip_gen: v7x
topology: tpu7x:2x2x1
jax: 0.10.0
libtpu: 0.0.40
codegen_flags: <defaults>
</compile_context>

<pallas_src>
import functools

import jax
import jax.numpy as jnp
from jax import lax
from jax.experimental import pallas as pl
from jax.experimental.pallas import tpu as pltpu


def _round_up(n, m):
    return ((n + m - 1) // m) * m


def critic_kernel(x_ref, w1_ref, b1_ref, w2_ref, b2_ref, w3_ref, b3_ref, o_ref,
                  *, matmul_dtype):
    # x tile: (Bt, K_pad) batch-major.  Weights: PyTorch (out, in) layout, zero-padded
    # to 128 multiples.  Biases: (D_pad, 1) columns.  b3: (1, 1) scalar in SMEM.
    x = x_ref[...].astype(matmul_dtype)
    w1 = w1_ref[...].astype(matmul_dtype)

    # fc1: contract on x's K axis directly (result is feature-major (D_pad, Bt), so
    # the batch maps to the 128-wide lane dimension for everything downstream).
    h1 = lax.dot_general(w1, x, (((1,), (1,)), ((), ())),
                         preferred_element_type=jnp.float32) + b1_ref[...]
    h1 = jnp.maximum(h1, 0.0)                                          # (D_pad, Bt)

    w2 = w2_ref[...].astype(matmul_dtype)
    h2 = jnp.dot(w2, h1.astype(matmul_dtype),
                 preferred_element_type=jnp.float32) + b2_ref[...]
    h2 = jnp.maximum(h2, 0.0)                                          # (D_pad, Bt)

    # fc3 has a single output unit: VPU multiply + cross-sublane (XLU) reduce.  A
    # (1, Bt) MXU matmul would waste a full MXU pass for 1/128 of the output rows.
    q = jnp.sum(w3_ref[...] * h2, axis=0, keepdims=True) + b3_ref[0, 0]  # (1, Bt)
    o_ref[...] = q.astype(o_ref.dtype)


def _choose_block_batch(B, K_pad, D_pad, vmem_budget_bytes=12 << 20):
    """Pick the largest lane-aligned batch tile that fits a conservative VMEM budget
    (kept under v5e's 16 MiB scoped default; v6e/v7x have >= 32 MiB scoped)."""
    # f32 bytes per batch lane per step: x tile (x2 pipeline buffers) + h1 + h2
    # temporaries + output row (x2).
    per_lane = 4 * (2 * K_pad + 2 * D_pad + 4)
    # Resident weights/biases are double-buffered by the default pipeline.
    weight_bytes = 2 * 4 * (D_pad * K_pad + D_pad * D_pad + 3 * D_pad + 1)
    avail = max(vmem_budget_bytes - weight_bytes, 128 * per_lane)
    cap = max(128, (avail // per_lane) // 128 * 128)
    return _round_up(min(_round_up(B, 128), 4096, cap), 128)


def critic_forward(x, params, *, block_batch=None, matmul_dtype=jnp.float32):
    """x: (B, input_shape) float32.  Returns q: (B, 1) float32."""
    w1, b1, w2, b2, w3, b3 = params          # padded params (see init_critic_params)
    B, K = x.shape
    D_pad, K_pad = w1.shape

    if block_batch is None:
        block_batch = _choose_block_batch(B, K_pad, D_pad)
    block_batch = _round_up(block_batch, 128)
    B_pad = _round_up(B, block_batch)
    grid = (B_pad // block_batch,)

    # Zero-pad batch & feature dims only (NO transpose — the fc1 contraction handles
    # the layout inside the kernel).  Padded rows/cols contribute exact zeros.
    xp = jnp.pad(x.astype(jnp.float32), ((0, B_pad - B), (0, K_pad - K)))

    const = lambda i: (0, 0)   # weights/biases stay resident across the batch grid

    flops = 2 * B_pad * (D_pad * K_pad + D_pad * D_pad + D_pad)
    bytes_accessed = 4 * (B_pad * K_pad                       # x
                          + D_pad * K_pad + D_pad * D_pad     # w1, w2
                          + 3 * D_pad + 1                     # biases + w3
                          + B_pad)                            # output

    q_row = pl.pallas_call(
        functools.partial(critic_kernel, matmul_dtype=matmul_dtype),
        out_shape=jax.ShapeDtypeStruct((1, B_pad), jnp.float32),
        grid_spec=pltpu.PrefetchScalarGridSpec(
            num_scalar_prefetch=0,
            grid=grid,
            in_specs=[
                pl.BlockSpec((block_batch, K_pad), lambda i: (i, 0)),   # x tile
                pl.BlockSpec(w1.shape, const),
                pl.BlockSpec(b1.shape, const),
                pl.BlockSpec(w2.shape, const),
                pl.BlockSpec(b2.shape, const),
                pl.BlockSpec(w3.shape, const),
                pl.BlockSpec(memory_space=pltpu.MemorySpace.SMEM),      # b3 scalar
            ],
            out_specs=pl.BlockSpec((1, block_batch), lambda i: (0, i)),  # lane-dense
        ),
        compiler_params=pltpu.CompilerParams(
            dimension_semantics=("parallel",),   # batch tiles are independent
        ),
        cost_estimate=pl.CostEstimate(
            flops=flops, transcendentals=0, bytes_accessed=bytes_accessed),
    )(xp, w1, b1, w2, b2, w3, b3)

    return q_row[0, :B].reshape(B, 1)


def init_critic_params(key, input_shape, critic_dim):
    """PyTorch nn.Linear-style init: U(-1/sqrt(fan_in), 1/sqrt(fan_in)).

    Weights are stored in PyTorch's (out, in) layout, zero-padded so every feature
    dim is a multiple of 128 (padded rows/cols contribute exactly 0 through ReLU and
    the final reduce).  Biases are (out_pad, 1) columns.  fc3's weight is a (D_pad, 1)
    column and its bias a (1, 1) scalar (placed in SMEM by the kernel).
    """
    K_pad = _round_up(input_shape, 128)
    D_pad = _round_up(critic_dim, 128)
    ks = jax.random.split(key, 6)

    def linear(kw, kb, fan_in, fan_out, in_pad, out_pad):
        bound = 1.0 / float(fan_in) ** 0.5
        w = jax.random.uniform(kw, (fan_out, fan_in), jnp.float32, -bound, bound)
        b = jax.random.uniform(kb, (fan_out,), jnp.float32, -bound, bound)
        wp = jnp.zeros((out_pad, in_pad), jnp.float32).at[:fan_out, :fan_in].set(w)
        bp = jnp.zeros((out_pad, 1), jnp.float32).at[:fan_out, 0].set(b)
        return wp, bp

    w1, b1 = linear(ks[0], ks[1], input_shape, critic_dim, K_pad, D_pad)
    w2, b2 = linear(ks[2], ks[3], critic_dim, critic_dim, D_pad, D_pad)
    w3r, b3 = linear(ks[4], ks[5], critic_dim, 1, D_pad, 1)
    w3 = w3r.T                      # (D_pad, 1) column for the in-kernel reduce
    return (w1, b1, w2, b2, w3, b3)


def critic_ref(x, params):
    """Pure-JAX reference (same math, batch-major)."""
    w1, b1, w2, b2, w3, b3 = params
    B, K = x.shape
    K_pad = w1.shape[1]
    xp = jnp.zeros((B, K_pad), x.dtype).at[:, :K].set(x)
    h1 = jnp.maximum(xp @ w1.T + b1.T, 0.0)
    h2 = jnp.maximum(h1 @ w2.T + b2.T, 0.0)
    return h2 @ w3 + b3


if __name__ == "__main__":
    # Small shapes consistent with Critic(input_shape, args.critic_dim)
    batch = 16
    input_shape = 32     # e.g. concatenated obs+state+actions features
    critic_dim = 64      # args.critic_dim

    key = jax.random.PRNGKey(0)
    k_x, k_p = jax.random.split(key)
    x = jax.random.normal(k_x, (batch, input_shape), jnp.float32)
    params = init_critic_params(k_p, input_shape, critic_dim)

    q = critic_forward(x, params)
    q = jax.block_until_ready(q)

    # Sanity check against pure-JAX reference (f32 matmul path).
    q_ref = critic_ref(x, params)
    assert q.shape == (batch, 1)
    assert jnp.allclose(q, q_ref, atol=1e-5, rtol=1e-5)

    print("KERNEL_OK")
</pallas_src>

<mosaic_0001>
module attributes {stable_mosaic.version = 11 : i64} {
  func.func @critic_kernel(%arg0: i32, %arg1: memref<128x128xf32, #tpu.memory_space<vmem>>, %arg2: memref<128x128xf32, #tpu.memory_space<vmem>>, %arg3: memref<128x1xf32, #tpu.memory_space<vmem>>, %arg4: memref<128x128xf32, #tpu.memory_space<vmem>>, %arg5: memref<128x1xf32, #tpu.memory_space<vmem>>, %arg6: memref<128x1xf32, #tpu.memory_space<vmem>>, %arg7: memref<1x1xf32, #tpu.memory_space<smem>>, %arg8: memref<1x128xf32, #tpu.memory_space<vmem>>) attributes {dimension_semantics = [#tpu.dimension_semantics<parallel>], iteration_bounds = array<i64: 1>, scalar_prefetch = 0 : i64, scratch_operands = 0 : i64, tpu.core_type = #tpu.core_type<tc>, window_params = [{transform_indices = @transform_0, window_bounds = array<i64: 128, 128>}, {pipeline_mode = #tpu.pipeline_mode<synchronous>, transform_indices = @transform_1, window_bounds = array<i64: 128, 128>}, {pipeline_mode = #tpu.pipeline_mode<synchronous>, transform_indices = @transform_2, window_bounds = array<i64: 128, 1>}, {pipeline_mode = #tpu.pipeline_mode<synchronous>, transform_indices = @transform_3, window_bounds = array<i64: 128, 128>}, {pipeline_mode = #tpu.pipeline_mode<synchronous>, transform_indices = @transform_4, window_bounds = array<i64: 128, 1>}, {pipeline_mode = #tpu.pipeline_mode<synchronous>, transform_indices = @transform_5, window_bounds = array<i64: 128, 1>}, {transform_indices = @transform_6, window_bounds = array<i64: 1, 1>}, {transform_indices = @transform_7, window_bounds = array<i64: 1, 128>}]} {
    %c0 = arith.constant 0 : index
    %c0_0 = arith.constant 0 : index
    %0 = vector.load %arg1[%c0, %c0_0] : memref<128x128xf32, #tpu.memory_space<vmem>>, vector<128x128xf32>
    %c0_1 = arith.constant 0 : index
    %c0_2 = arith.constant 0 : index
    %1 = vector.load %arg2[%c0_1, %c0_2] : memref<128x128xf32, #tpu.memory_space<vmem>>, vector<128x128xf32>
    %cst = arith.constant dense<0.000000e+00> : vector<128x128xf32>
    %2 = tpu.matmul %1, %0, %cst {dimension_numbers = #tpu.dot_dimension_numbers<[1], [1], [0], [0], [0, 0, 1, 0], [], []>} : vector<128x128xf32>, vector<128x128xf32>, vector<128x128xf32> -> vector<128x128xf32>
    %c0_3 = arith.constant 0 : index
    %c0_4 = arith.constant 0 : index
    %3 = vector.load %arg3[%c0_3, %c0_4] : memref<128x1xf32, #tpu.memory_space<vmem>>, vector<128x1xf32>
    %4 = vector.broadcast %3 : vector<128x1xf32> to vector<128x128xf32>
    %5 = arith.addf %2, %4 : vector<128x128xf32>
    %cst_5 = arith.constant 0.000000e+00 : f32
    %6 = vector.broadcast %cst_5 : f32 to vector<128x128xf32>
    %7 = arith.maximumf %5, %6 : vector<128x128xf32>
    %c0_6 = arith.constant 0 : index
    %c0_7 = arith.constant 0 : index
    %8 = vector.load %arg4[%c0_6, %c0_7] : memref<128x128xf32, #tpu.memory_space<vmem>>, vector<128x128xf32>
    %cst_8 = arith.constant dense<0.000000e+00> : vector<128x128xf32>
    %9 = tpu.matmul %8, %7, %cst_8 {dimension_numbers = #tpu.dot_dimension_numbers<[1], [0], [0], [1], [0, 0, 1, 1], [], []>} : vector<128x128xf32>, vector<128x128xf32>, vector<128x128xf32> -> vector<128x128xf32>
    %c0_9 = arith.constant 0 : index
    %c0_10 = arith.constant 0 : index
    %10 = vector.load %arg5[%c0_9, %c0_10] : memref<128x1xf32, #tpu.memory_space<vmem>>, vector<128x1xf32>
    %11 = vector.broadcast %10 : vector<128x1xf32> to vector<128x128xf32>
    %12 = arith.addf %9, %11 : vector<128x128xf32>
    %cst_11 = arith.constant 0.000000e+00 : f32
    %13 = vector.broadcast %cst_11 : f32 to vector<128x128xf32>
    %14 = arith.maximumf %12, %13 : vector<128x128xf32>
    %c0_12 = arith.constant 0 : index
    %c0_13 = arith.constant 0 : index
    %15 = vector.load %arg6[%c0_12, %c0_13] : memref<128x1xf32, #tpu.memory_space<vmem>>, vector<128x1xf32>
    %16 = vector.broadcast %15 : vector<128x1xf32> to vector<128x128xf32>
    %17 = arith.mulf %16, %14 : vector<128x128xf32>
    %cst_14 = arith.constant dense<0.000000e+00> : vector<128xf32>
    %18 = vector.multi_reduction <add>, %17, %cst_14 [0] : vector<128x128xf32> to vector<128xf32>
    %19 = vector.shape_cast %18 : vector<128xf32> to vector<1x128xf32>
    %c0_15 = arith.constant 0 : index
    %c0_16 = arith.constant 0 : index
    %20 = memref.load %arg7[%c0_15, %c0_16] : memref<1x1xf32, #tpu.memory_space<smem>>
    %21 = vector.broadcast %20 : f32 to vector<1x128xf32>
    %22 = arith.addf %19, %21 : vector<1x128xf32>
    %c0_17 = arith.constant 0 : index
    %c0_18 = arith.constant 0 : index
    %23 = vector.load %arg8[%c0_17, %c0_18] : memref<1x128xf32, #tpu.memory_space<vmem>>, vector<1x128xf32>
    tpu.vector_store %arg8[%c0_17, %c0_18], %22 {strides = array<i32>} : memref<1x128xf32, #tpu.memory_space<vmem>>, vector<1x128xf32>,
    return
  }
  func.func @transform_0(%arg0: i32) -> (i32, i32) {
    %c0_i32 = arith.constant 0 : i32
    %c0_i32_0 = arith.constant 0 : i32
    return %arg0, %c0_i32 : i32, i32
  }
  func.func @transform_1(%arg0: i32) -> (i32, i32) {
    %c0_i32 = arith.constant 0 : i32
    %c0_i32_0 = arith.constant 0 : i32
    %c0_i32_1 = arith.constant 0 : i32
    return %c0_i32, %c0_i32_0 : i32, i32
  }
  func.func @transform_2(%arg0: i32) -> (i32, i32) {
    %c0_i32 = arith.constant 0 : i32
    %c0_i32_0 = arith.constant 0 : i32
    %c0_i32_1 = arith.constant 0 : i32
    return %c0_i32, %c0_i32_0 : i32, i32
  }
  func.func @transform_3(%arg0: i32) -> (i32, i32) {
    %c0_i32 = arith.constant 0 : i32
    %c0_i32_0 = arith.constant 0 : i32
    %c0_i32_1 = arith.constant 0 : i32
    return %c0_i32, %c0_i32_0 : i32, i32
  }
  func.func @transform_4(%arg0: i32) -> (i32, i32) {
    %c0_i32 = arith.constant 0 : i32
    %c0_i32_0 = arith.constant 0 : i32
    %c0_i32_1 = arith.constant 0 : i32
    return %c0_i32, %c0_i32_0 : i32, i32
  }
  func.func @transform_5(%arg0: i32) -> (i32, i32) {
    %c0_i32 = arith.constant 0 : i32
    %c0_i32_0 = arith.constant 0 : i32
    %c0_i32_1 = arith.constant 0 : i32
    return %c0_i32, %c0_i32_0 : i32, i32
  }
  func.func @transform_6(%arg0: i32) -> (i32, i32) {
    %c0_i32 = arith.constant 0 : i32
    %c0_i32_0 = arith.constant 0 : i32
    %c0_i32_1 = arith.constant 0 : i32
    return %c0_i32, %c0_i32_0 : i32, i32
  }
  func.func @transform_7(%arg0: i32) -> (i32, i32) {
    %c0_i32 = arith.constant 0 : i32
    %c0_i32_0 = arith.constant 0 : i32
    return %c0_i32, %arg0 : i32, i32
  }
}

</mosaic_0001>

<llo_original>
// kernel: tpu_custom_call.1
$region0: #{tpu_custom_call.1}
  #allocation0 [shape = 'u32[]', space=smem, size = 0x4, offset = 0x4, fixed_abs, tag = 'smem constant byte address 0x4 - core index']
  #allocation1 [shape = 'u32[144,128]{1,0:T(1,128)}', space=vmem, size = 0x12000, scoped, tag = 'internal scratch']
  #allocation2 [shape = 'f32[1,1]{1,0:T(1,128)S(6)}', space=smem, size = 0x200, scoped, tag = 'scoped memory for tpu_custom_call.1']
  %s0 = inlined_call_operand.vmem [shape: f32[128,128], index: 0, kind: input, shape index: {}]
  %s1 = inlined_call_operand.vmem [shape: f32[128,128], index: 1, kind: input, shape index: {}]
  %s2 = inlined_call_operand.vmem [shape: f32[128,1], index: 2, kind: input, shape index: {}]
  %s3 = inlined_call_operand.vmem [shape: f32[128,128], index: 3, kind: input, shape index: {}]
  %s4 = inlined_call_operand.vmem [shape: f32[128,1], index: 4, kind: input, shape index: {}]
  %s5 = inlined_call_operand.vmem [shape: f32[128,1], index: 5, kind: input, shape index: {}]
  %s6 = inlined_call_operand.<no memory space> [shape: f32[1,1], index: 6, kind: input, shape index: {}]
  %s7 = inlined_call_operand.hbm [shape: f32[1,128], index: 7, kind: output, shape index: {}]
  %s8 = sld [smem:[#allocation0]]
  $region38: #{tpu_custom_call.1} parent=0
    _
  %s10 = ssub.s32 1, %s8
  %s11 = scalar_select 0, %s10, %s8
  %12 = sst [smem:[#allocation2]] %s6
  $region1: #{tpu_custom_call.1} parent=0
    #allocation3 [shape = 'u8[512]{0}', space=vmem, size = 0x400, scoped, tag = 'output window, operand 0, single buffered']
    #allocation4 [shape = 's32[1]{0}', space=sflag, size = 0x4, scoped, tag = 'scoped memory for tpu_custom_call.1']
    %13 = vsyncpa [#allocation4], 0
    // Predicated region
    $region2: #{tpu_custom_call.1} parent=1 // pred_check
      _
    $region3: #{tpu_custom_call.1} parent=1 // pred_check_branch
      %15 = sbr.rel (0) target = $region5
    $region4: #{tpu_custom_call.1} parent=1 // pred_region
      _
    $region5: #{tpu_custom_call.1} parent=1 // pred_fallthru
      _
    // Predicated region
    $region6: #{tpu_custom_call.1} parent=1 // pred_check
      _
    $region7: #{tpu_custom_call.1} parent=1 // pred_check_branch
      %17 = sbr.rel (0) target = $region9
    $region8: #{tpu_custom_call.1} parent=1 // pred_region
      _
    $region9: #{tpu_custom_call.1} parent=1 // pred_fallthru
      _
    // Predicated region
    $region10: #{tpu_custom_call.1} parent=1 // pred_check
      _
    $region11: #{tpu_custom_call.1} parent=1 // pred_check_branch
      %19 = sbr.rel (0) target = $region13
    $region12: #{tpu_custom_call.1} parent=1 // pred_region
      _
    $region13: #{tpu_custom_call.1} parent=1 // pred_fallthru
      _
    // Predicated region
    $region14: #{tpu_custom_call.1} parent=1 // pred_check
      _
    $region15: #{tpu_custom_call.1} parent=1 // pred_check_branch
      %21 = sbr.rel (0) target = $region17
    $region16: #{tpu_custom_call.1} parent=1 // pred_region
      _
    $region17: #{tpu_custom_call.1} parent=1 // pred_fallthru
      _
    // Predicated region
    $region18: #{tpu_custom_call.1} parent=1 // pred_check
      _
    $region19: #{tpu_custom_call.1} parent=1 // pred_check_branch
      %23 = sbr.rel (0) target = $region21
    $region20: #{tpu_custom_call.1} parent=1 // pred_region
      _
    $region21: #{tpu_custom_call.1} parent=1 // pred_fallthru
      _
    // Predicated region
    $region22: #{tpu_custom_call.1} parent=1 // pred_check
      _
    $region23: #{tpu_custom_call.1} parent=1 // pred_check_branch
      %25 = sbr.rel (0) target = $region25
    $region24: #{tpu_custom_call.1} parent=1 // pred_region
      _
    $region25: #{tpu_custom_call.1} parent=1 // pred_fallthru
      _
    // Predicated region
    $region26: #{tpu_custom_call.1} parent=1 // pred_check
      _
    $region27: #{tpu_custom_call.1} parent=1 // pred_check_branch
      %27 = sbr.rel (0) target = $region29
    $region28: #{tpu_custom_call.1} parent=1 // pred_region
      _
    $region29: #{tpu_custom_call.1} parent=1 // pred_fallthru
      _
    %v28 = vld [vmem:[%s0] sm:$0xff]
    %v29 = vld [vmem:[%s0 + $0x8] sm:$0xff]
    %v30 = vld [vmem:[%s0 + $0x10] sm:$0xff]
    %v31 = vld [vmem:[%s0 + $0x18] sm:$0xff]
    %v32 = vld [vmem:[%s0 + $0x20] sm:$0xff]
    %v33 = vld [vmem:[%s0 + $0x28] sm:$0xff]
    %v34 = vld [vmem:[%s0 + $0x30] sm:$0xff]
    %v35 = vld [vmem:[%s0 + $0x38] sm:$0xff]
    %v36 = vld [vmem:[%s0 + $0x40] sm:$0xff]
    %v37 = vld [vmem:[%s0 + $0x48] sm:$0xff]
    %v38 = vld [vmem:[%s0 + $0x50] sm:$0xff]
    %v39 = vld [vmem:[%s0 + $0x58] sm:$0xff]
    %v40 = vld [vmem:[%s0 + $0x60] sm:$0xff]
    %v41 = vld [vmem:[%s0 + $0x68] sm:$0xff]
    %v42 = vld [vmem:[%s0 + $0x70] sm:$0xff]
    %v43 = vld [vmem:[%s0 + $0x78] sm:$0xff]
    %v44 = vld [vmem:[%s1] sm:$0xff]
    %v45 = vld [vmem:[%s1 + $0x8] sm:$0xff]
    %v46 = vld [vmem:[%s1 + $0x10] sm:$0xff]
    %v47 = vld [vmem:[%s1 + $0x18] sm:$0xff]
    %v48 = vld [vmem:[%s1 + $0x20] sm:$0xff]
    %v49 = vld [vmem:[%s1 + $0x28] sm:$0xff]
    %v50 = vld [vmem:[%s1 + $0x30] sm:$0xff]
    %v51 = vld [vmem:[%s1 + $0x38] sm:$0xff]
    %v52 = vld [vmem:[%s1 + $0x40] sm:$0xff]
    %v53 = vld [vmem:[%s1 + $0x48] sm:$0xff]
    %v54 = vld [vmem:[%s1 + $0x50] sm:$0xff]
    %v55 = vld [vmem:[%s1 + $0x58] sm:$0xff]
    %v56 = vld [vmem:[%s1 + $0x60] sm:$0xff]
    %v57 = vld [vmem:[%s1 + $0x68] sm:$0xff]
    %v58 = vld [vmem:[%s1 + $0x70] sm:$0xff]
    %v59 = vld [vmem:[%s1 + $0x78] sm:$0xff]
    %v60 = vld [vmem:[%s2] sm:$0xff]
    %v61 = vld [vmem:[%s2 + $0x8] sm:$0xff]
    %v62 = vld [vmem:[%s2 + $0x10] sm:$0xff]
    %v63 = vld [vmem:[%s2 + $0x18] sm:$0xff]
    %v64 = vld [vmem:[%s2 + $0x20] sm:$0xff]
    %v65 = vld [vmem:[%s2 + $0x28] sm:$0xff]
    %v66 = vld [vmem:[%s2 + $0x30] sm:$0xff]
    %v67 = vld [vmem:[%s2 + $0x38] sm:$0xff]
    %v68 = vld [vmem:[%s2 + $0x40] sm:$0xff]
    %v69 = vld [vmem:[%s2 + $0x48] sm:$0xff]
    %v70 = vld [vmem:[%s2 + $0x50] sm:$0xff]
    %v71 = vld [vmem:[%s2 + $0x58] sm:$0xff]
    %v72 = vld [vmem:[%s2 + $0x60] sm:$0xff]
    %v73 = vld [vmem:[%s2 + $0x68] sm:$0xff]
    %v74 = vld [vmem:[%s2 + $0x70] sm:$0xff]
    %v75 = vld [vmem:[%s2 + $0x78] sm:$0xff]
    %77 = vset.pattern.permute.xlu0 0
    %78 = vperm.xlu0 %77, %v60
    %v79 = vpop.permute.xlu0 %78
    %82 = vset.pattern.permute.xlu0 0
    %83 = vperm.xlu0 %82, %v61
    %v84 = vpop.permute.xlu0 %83
    %87 = vset.pattern.permute.xlu0 0
    %88 = vperm.xlu0 %87, %v62
    %v89 = vpop.permute.xlu0 %88
    %92 = vset.pattern.permute.xlu0 0
    %93 = vperm.xlu0 %92, %v63
    %v94 = vpop.permute.xlu0 %93
    %97 = vset.pattern.permute.xlu0 0
    %98 = vperm.xlu0 %97, %v64
    %v99 = vpop.permute.xlu0 %98
    %102 = vset.pattern.permute.xlu0 0
    %103 = vperm.xlu0 %102, %v65
    %v104 = vpop.permute.xlu0 %103
    %107 = vset.pattern.permute.xlu0 0
    %108 = vperm.xlu0 %107, %v66
    %v109 = vpop.permute.xlu0 %108
    %112 = vset.pattern.permute.xlu0 0
    %113 = vperm.xlu0 %112, %v67
    %v114 = vpop.permute.xlu0 %113
    %117 = vset.pattern.permute.xlu0 0
    %118 = vperm.xlu0 %117, %v68
    %v119 = vpop.permute.xlu0 %118
    %122 = vset.pattern.permute.xlu0 0
    %123 = vperm.xlu0 %122, %v69
    %v124 = vpop.permute.xlu0 %123
    %127 = vset.pattern.permute.xlu0 0
    %128 = vperm.xlu0 %127, %v70
    %v129 = vpop.permute.xlu0 %128
    %132 = vset.pattern.permute.xlu0 0
    %133 = vperm.xlu0 %132, %v71
    %v134 = vpop.permute.xlu0 %133
    %137 = vset.pattern.permute.xlu0 0
    %138 = vperm.xlu0 %137, %v72
    %v139 = vpop.permute.xlu0 %138
    %142 = vset.pattern.permute.xlu0 0
    %143 = vperm.xlu0 %142, %v73
    %v144 = vpop.permute.xlu0 %143
    %147 = vset.pattern.permute.xlu0 0
    %148 = vperm.xlu0 %147, %v74
    %v149 = vpop.permute.xlu0 %148
    %152 = vset.pattern.permute.xlu0 0
    %153 = vperm.xlu0 %152, %v75
    %v154 = vpop.permute.xlu0 %153
    %156 = vmatprep.subr.mxu0 0.0
    %157 = vmatpush1.xpose.msra.mxu0 %v28
    %158 = vmatprep.subr.mxu0 0.0
    %159 = vmatpush1.xpose.msra.mxu0 %v29
    %160 = vmatprep.subr.mxu0 0.0
    %161 = vmatpush1.xpose.msra.mxu0 %v30
    %162 = vmatprep.subr.mxu0 0.0
    %163 = vmatpush1.xpose.msra.mxu0 %v31
    %164 = vmatprep.subr.mxu0 0.0
    %165 = vmatpush1.xpose.msra.mxu0 %v32
    %166 = vmatprep.subr.mxu0 0.0
    %167 = vmatpush1.xpose.msra.mxu0 %v33
    %168 = vmatprep.subr.mxu0 0.0
    %169 = vmatpush1.xpose.msra.mxu0 %v34
    %170 = vmatprep.subr.mxu0 0.0
    %171 = vmatpush1.xpose.msra.mxu0 %v35
    %172 = vmatprep.subr.mxu0 0.0
    %173 = vmatpush1.xpose.msra.mxu0 %v36
    %174 = vmatprep.subr.mxu0 0.0
    %175 = vmatpush1.xpose.msra.mxu0 %v37
    %176 = vmatprep.subr.mxu0 0.0
    %177 = vmatpush1.xpose.msra.mxu0 %v38
    %178 = vmatprep.subr.mxu0 0.0
    %179 = vmatpush1.xpose.msra.mxu0 %v39
    %180 = vmatprep.subr.mxu0 0.0
    %181 = vmatpush1.xpose.msra.mxu0 %v40
    %182 = vmatprep.subr.mxu0 0.0
    %183 = vmatpush1.xpose.msra.mxu0 %v41
    %184 = vmatprep.subr.mxu0 0.0
    %185 = vmatpush1.xpose.msra.mxu0 %v42
    %186 = vmatprep.subr.mxu0 0.0
    %187 = vmatpush1.xpose.msra.mxu0 %v43
    %188 = vmatprep.subr.mxu0 0.0
    %189 = vmatpush1.xpose.msra.mxu0 0.0
    %190 = vmatprep.subr.mxu0 0.0
    %191 = vmatpush1.xpose.msra.mxu0 0.0
    %192 = vmatprep.subr.mxu0 0.0
    %193 = vmatpush1.xpose.msra.mxu0 0.0
    %194 = vmatprep.subr.mxu0 0.0
    %195 = vmatpush1.xpose.msra.mxu0 0.0
    %196 = vmatprep.subr.mxu0 0.0
    %197 = vmatpush1.xpose.msra.mxu0 0.0
    %198 = vmatprep.subr.mxu0 0.0
    %199 = vmatpush1.xpose.msra.mxu0 0.0
    %200 = vmatprep.subr.mxu0 0.0
    %201 = vmatpush1.xpose.msra.mxu0 0.0
    %202 = vmatprep.subr.mxu0 0.0
    %203 = vmatpush1.xpose.msra.mxu0 0.0
    %204 = vmatprep.subr.mxu0 0.0
    %205 = vmatpush1.xpose.msra.mxu0 0.0
    %206 = vmatprep.subr.mxu0 0.0
    %207 = vmatpush1.xpose.msra.mxu0 0.0
    %208 = vmatprep.subr.mxu0 0.0
    %209 = vmatpush1.xpose.msra.mxu0 0.0
    %210 = vmatprep.subr.mxu0 0.0
    %211 = vmatpush1.xpose.msra.mxu0 0.0
    %212 = vmatprep.subr.mxu0 0.0
    %213 = vmatpush1.xpose.msra.mxu0 0.0
    %214 = vmatprep.subr.mxu0 0.0
    %215 = vmatpush1.xpose.msra.mxu0 0.0
    %216 = vmatprep.subr.mxu0 0.0
    %217 = vmatpush1.xpose.msra.mxu0 0.0
    %218 = vmatprep.subr.mxu0 0.0
    %219 = vmatpush1.xpose.msra.mxu0 0.0
    %220 = vmatprep.mubr.f32.mxu0 0.0
    %221 = vmatmul.mubr.f32.gmra.mrb[0].mxu0 %v44
    %v222 = vpop.f32.mrb[0].mxu0
    %v223 = vadd.f32 %v79, %v222
    %v224 = vpop.f32.mrb[0].mxu0
    %225 = vmatprep.mubr.f32.mxu0 0.0
    %226 = vmatmul.mubr.f32.gmra.mrb[0].mxu0 %v45
    %v227 = vpop.f32.mrb[0].mxu0
    %v228 = vadd.f32 %v84, %v227
    %v229 = vpop.f32.mrb[0].mxu0
    %230 = vmatprep.mubr.f32.mxu0 0.0
    %231 = vmatmul.mubr.f32.gmra.mrb[0].mxu0 %v46
    %v232 = vpop.f32.mrb[0].mxu0
    %v233 = vadd.f32 %v89, %v232
    %v234 = vpop.f32.mrb[0].mxu0
    %235 = vmatprep.mubr.f32.mxu0 0.0
    %236 = vmatmul.mubr.f32.gmra.mrb[0].mxu0 %v47
    %v237 = vpop.f32.mrb[0].mxu0
    %v238 = vadd.f32 %v94, %v237
    %v239 = vpop.f32.mrb[0].mxu0
    %240 = vmatprep.mubr.f32.mxu0 0.0
    %241 = vmatmul.mubr.f32.gmra.mrb[0].mxu0 %v48
    %v242 = vpop.f32.mrb[0].mxu0
    %v243 = vadd.f32 %v99, %v242
    %v244 = vpop.f32.mrb[0].mxu0
    %245 = vmatprep.mubr.f32.mxu0 0.0
    %246 = vmatmul.mubr.f32.gmra.mrb[0].mxu0 %v49
    %v247 = vpop.f32.mrb[0].mxu0
    %v248 = vadd.f32 %v104, %v247
    %v249 = vpop.f32.mrb[0].mxu0
    %250 = vmatprep.mubr.f32.mxu0 0.0
    %251 = vmatmul.mubr.f32.gmra.mrb[0].mxu0 %v50
    %v252 = vpop.f32.mrb[0].mxu0
    %v253 = vadd.f32 %v109, %v252
    %v254 = vpop.f32.mrb[0].mxu0
    %255 = vmatprep.mubr.f32.mxu0 0.0
    %256 = vmatmul.mubr.f32.gmra.mrb[0].mxu0 %v51
    %v257 = vpop.f32.mrb[0].mxu0
    %v258 = vadd.f32 %v114, %v257
    %v259 = vpop.f32.mrb[0].mxu0
    %260 = vmatprep.mubr.f32.mxu0 0.0
    %261 = vmatmul.mubr.f32.gmra.mrb[0].mxu0 %v52
    %v262 = vpop.f32.mrb[0].mxu0
    %v263 = vadd.f32 %v119, %v262
    %v264 = vpop.f32.mrb[0].mxu0
    %265 = vmatprep.mubr.f32.mxu0 0.0
    %266 = vmatmul.mubr.f32.gmra.mrb[0].mxu0 %v53
    %v267 = vpop.f32.mrb[0].mxu0
    %v268 = vadd.f32 %v124, %v267
    %v269 = vpop.f32.mrb[0].mxu0
    %270 = vmatprep.mubr.f32.mxu0 0.0
    %271 = vmatmul.mubr.f32.gmra.mrb[0].mxu0 %v54
    %v272 = vpop.f32.mrb[0].mxu0
    %v273 = vadd.f32 %v129, %v272
    %v274 = vpop.f32.mrb[0].mxu0
    %275 = vmatprep.mubr.f32.mxu0 0.0
    %276 = vmatmul.mubr.f32.gmra.mrb[0].mxu0 %v55
    %v277 = vpop.f32.mrb[0].mxu0
    %v278 = vadd.f32 %v134, %v277
    %v279 = vpop.f32.mrb[0].mxu0
    %280 = vmatprep.mubr.f32.mxu0 0.0
    %281 = vmatmul.mubr.f32.gmra.mrb[0].mxu0 %v56
    %v282 = vpop.f32.mrb[0].mxu0
    %v283 = vadd.f32 %v139, %v282
    %v284 = vpop.f32.mrb[0].mxu0
    %285 = vmatprep.mubr.f32.mxu0 0.0
    %286 = vmatmul.mubr.f32.gmra.mrb[0].mxu0 %v57
    %v287 = vpop.f32.mrb[0].mxu0
    %v288 = vadd.f32 %v144, %v287
    %v289 = vpop.f32.mrb[0].mxu0
    %290 = vmatprep.mubr.f32.mxu0 0.0
    %291 = vmatmul.mubr.f32.gmra.mrb[0].mxu0 %v58
    %v292 = vpop.f32.mrb[0].mxu0
    %v293 = vadd.f32 %v149, %v292
    %v294 = vpop.f32.mrb[0].mxu0
    %295 = vmatprep.mubr.f32.mxu0 0.0
    %296 = vmatmul.mubr.f32.gmra.mrb[0].mxu0 %v59
    %v297 = vpop.f32.mrb[0].mxu0
    %v298 = vadd.f32 %v154, %v297
    %v299 = vpop.f32.mrb[0].mxu0
    %300 = vdwg.mxu0
    %v301 = vmax.f32 %v223, 0.0
    %v302 = vmax.f32 %v228, 0.0
    %v303 = vmax.f32 %v233, 0.0
    %v304 = vmax.f32 %v238, 0.0
    %v305 = vmax.f32 %v243, 0.0
    %v306 = vmax.f32 %v248, 0.0
    %v307 = vmax.f32 %v253, 0.0
    %v308 = vmax.f32 %v258, 0.0
    %v309 = vmax.f32 %v263, 0.0
    %v310 = vmax.f32 %v268, 0.0
    %v311 = vmax.f32 %v273, 0.0
    %v312 = vmax.f32 %v278, 0.0
    %v313 = vmax.f32 %v283, 0.0
    %v314 = vmax.f32 %v288, 0.0
    %v315 = vmax.f32 %v293, 0.0
    %v316 = vmax.f32 %v298, 0.0
    %v317 = vld [vmem:[%s3] sm:$0xff]
    %v318 = vld [vmem:[%s3 + $0x8] sm:$0xff]
    %v319 = vld [vmem:[%s3 + $0x10] sm:$0xff]
    %v320 = vld [vmem:[%s3 + $0x18] sm:$0xff]
    %v321 = vld [vmem:[%s3 + $0x20] sm:$0xff]
    %v322 = vld [vmem:[%s3 + $0x28] sm:$0xff]
    %v323 = vld [vmem:[%s3 + $0x30] sm:$0xff]
    %v324 = vld [vmem:[%s3 + $0x38] sm:$0xff]
    %v325 = vld [vmem:[%s3 + $0x40] sm:$0xff]
    %v326 = vld [vmem:[%s3 + $0x48] sm:$0xff]
    %v327 = vld [vmem:[%s3 + $0x50] sm:$0xff]
    %v328 = vld [vmem:[%s3 + $0x58] sm:$0xff]
    %v329 = vld [vmem:[%s3 + $0x60] sm:$0xff]
    %v330 = vld [vmem:[%s3 + $0x68] sm:$0xff]
    %v331 = vld [vmem:[%s3 + $0x70] sm:$0xff]
    %v332 = vld [vmem:[%s3 + $0x78] sm:$0xff]
    %v333 = vld [vmem:[%s4] sm:$0xff]
    %v334 = vld [vmem:[%s4 + $0x8] sm:$0xff]
    %v335 = vld [vmem:[%s4 + $0x10] sm:$0xff]
    %v336 = vld [vmem:[%s4 + $0x18] sm:$0xff]
    %v337 = vld [vmem:[%s4 + $0x20] sm:$0xff]
    %v338 = vld [vmem:[%s4 + $0x28] sm:$0xff]
    %v339 = vld [vmem:[%s4 + $0x30] sm:$0xff]
    %v340 = vld [vmem:[%s4 + $0x38] sm:$0xff]
    %v341 = vld [vmem:[%s4 + $0x40] sm:$0xff]
    %v342 = vld [vmem:[%s4 + $0x48] sm:$0xff]
    %v343 = vld [vmem:[%s4 + $0x50] sm:$0xff]
    %v344 = vld [vmem:[%s4 + $0x58] sm:$0xff]
    %v345 = vld [vmem:[%s4 + $0x60] sm:$0xff]
    %v346 = vld [vmem:[%s4 + $0x68] sm:$0xff]
    %v347 = vld [vmem:[%s4 + $0x70] sm:$0xff]
    %v348 = vld [vmem:[%s4 + $0x78] sm:$0xff]
    %350 = vset.pattern.permute.xlu0 0
    %351 = vperm.xlu0 %350, %v333
    %v352 = vpop.permute.xlu0 %351
    %355 = vset.pattern.permute.xlu0 0
    %356 = vperm.xlu0 %355, %v334
    %v357 = vpop.permute.xlu0 %356
    %360 = vset.pattern.permute.xlu0 0
    %361 = vperm.xlu0 %360, %v335
    %v362 = vpop.permute.xlu0 %361
    %365 = vset.pattern.permute.xlu0 0
    %366 = vperm.xlu0 %365, %v336
    %v367 = vpop.permute.xlu0 %366
    %370 = vset.pattern.permute.xlu0 0
    %371 = vperm.xlu0 %370, %v337
    %v372 = vpop.permute.xlu0 %371
    %375 = vset.pattern.permute.xlu0 0
    %376 = vperm.xlu0 %375, %v338
    %v377 = vpop.permute.xlu0 %376
    %380 = vset.pattern.permute.xlu0 0
    %381 = vperm.xlu0 %380, %v339
    %v382 = vpop.permute.xlu0 %381
    %385 = vset.pattern.permute.xlu0 0
    %386 = vperm.xlu0 %385, %v340
    %v387 = vpop.permute.xlu0 %386
    %390 = vset.pattern.permute.xlu0 0
    %391 = vperm.xlu0 %390, %v341
    %v392 = vpop.permute.xlu0 %391
    %395 = vset.pattern.permute.xlu0 0
    %396 = vperm.xlu0 %395, %v342
    %v397 = vpop.permute.xlu0 %396
    %400 = vset.pattern.permute.xlu0 0
    %401 = vperm.xlu0 %400, %v343
    %v402 = vpop.permute.xlu0 %401
    %405 = vset.pattern.permute.xlu0 0
    %406 = vperm.xlu0 %405, %v344
    %v407 = vpop.permute.xlu0 %406
    %410 = vset.pattern.permute.xlu0 0
    %411 = vperm.xlu0 %410, %v345
    %v412 = vpop.permute.xlu0 %411
    %415 = vset.pattern.permute.xlu0 0
    %416 = vperm.xlu0 %415, %v346
    %v417 = vpop.permute.xlu0 %416
    %420 = vset.pattern.permute.xlu0 0
    %421 = vperm.xlu0 %420, %v347
    %v422 = vpop.permute.xlu0 %421
    %425 = vset.pattern.permute.xlu0 0
    %426 = vperm.xlu0 %425, %v348
    %v427 = vpop.permute.xlu0 %426
    %429 = vmatprep.subr.mxu0 0.0
    %430 = vmatpush1.msra.mxu0 %v301
    %431 = vmatprep.subr.mxu0 0.0
    %432 = vmatpush1.msra.mxu0 %v302
    %433 = vmatprep.subr.mxu0 0.0
    %434 = vmatpush1.msra.mxu0 %v303
    %435 = vmatprep.subr.mxu0 0.0
    %436 = vmatpush1.msra.mxu0 %v304
    %437 = vmatprep.subr.mxu0 0.0
    %438 = vmatpush1.msra.mxu0 %v305
    %439 = vmatprep.subr.mxu0 0.0
    %440 = vmatpush1.msra.mxu0 %v306
    %441 = vmatprep.subr.mxu0 0.0
    %442 = vmatpush1.msra.mxu0 %v307
    %443 = vmatprep.subr.mxu0 0.0
    %444 = vmatpush1.msra.mxu0 %v308
    %445 = vmatprep.subr.mxu0 0.0
    %446 = vmatpush1.msra.mxu0 %v309
    %447 = vmatprep.subr.mxu0 0.0
    %448 = vmatpush1.msra.mxu0 %v310
    %449 = vmatprep.subr.mxu0 0.0
    %450 = vmatpush1.msra.mxu0 %v311
    %451 = vmatprep.subr.mxu0 0.0
    %452 = vmatpush1.msra.mxu0 %v312
    %453 = vmatprep.subr.mxu0 0.0
    %454 = vmatpush1.msra.mxu0 %v313
    %455 = vmatprep.subr.mxu0 0.0
    %456 = vmatpush1.msra.mxu0 %v314
    %457 = vmatprep.subr.mxu0 0.0
    %458 = vmatpush1.msra.mxu0 %v315
    %459 = vmatprep.subr.mxu0 0.0
    %460 = vmatpush1.msra.mxu0 %v316
    %461 = vmatprep.subr.mxu0 0.0
    %462 = vmatpush1.msra.mxu0 0.0
    %463 = vmatprep.subr.mxu0 0.0
    %464 = vmatpush1.msra.mxu0 0.0
    %465 = vmatprep.subr.mxu0 0.0
    %466 = vmatpush1.msra.mxu0 0.0
    %467 = vmatprep.subr.mxu0 0.0
    %468 = vmatpush1.msra.mxu0 0.0
    %469 = vmatprep.subr.mxu0 0.0
    %470 = vmatpush1.msra.mxu0 0.0
    %471 = vmatprep.subr.mxu0 0.0
    %472 = vmatpush1.msra.mxu0 0.0
    %473 = vmatprep.subr.mxu0 0.0
    %474 = vmatpush1.msra.mxu0 0.0
    %475 = vmatprep.subr.mxu0 0.0
    %476 = vmatpush1.msra.mxu0 0.0
    %477 = vmatprep.subr.mxu0 0.0
    %478 = vmatpush1.msra.mxu0 0.0
    %479 = vmatprep.subr.mxu0 0.0
    %480 = vmatpush1.msra.mxu0 0.0
    %481 = vmatprep.subr.mxu0 0.0
    %482 = vmatpush1.msra.mxu0 0.0
    %483 = vmatprep.subr.mxu0 0.0
    %484 = vmatpush1.msra.mxu0 0.0
    %485 = vmatprep.subr.mxu0 0.0
    %486 = vmatpush1.msra.mxu0 0.0
    %487 = vmatprep.subr.mxu0 0.0
    %488 = vmatpush1.msra.mxu0 0.0
    %489 = vmatprep.subr.mxu0 0.0
    %490 = vmatpush1.msra.mxu0 0.0
    %491 = vmatprep.subr.mxu0 0.0
    %492 = vmatpush1.msra.mxu0 0.0
    %493 = vmatprep.mubr.f32.mxu0 0.0
    %494 = vmatmul.mubr.f32.gmra.mrb[0].mxu0 %v317
    %v495 = vpop.f32.mrb[0].mxu0
    %v496 = vadd.f32 %v352, %v495
    %v497 = vpop.f32.mrb[0].mxu0
    %498 = vmatprep.mubr.f32.mxu0 0.0
    %499 = vmatmul.mubr.f32.gmra.mrb[0].mxu0 %v318
    %v500 = vpop.f32.mrb[0].mxu0
    %v501 = vadd.f32 %v357, %v500
    %v502 = vpop.f32.mrb[0].mxu0
    %503 = vmatprep.mubr.f32.mxu0 0.0
    %504 = vmatmul.mubr.f32.gmra.mrb[0].mxu0 %v319
    %v505 = vpop.f32.mrb[0].mxu0
    %v506 = vadd.f32 %v362, %v505
    %v507 = vpop.f32.mrb[0].mxu0
    %508 = vmatprep.mubr.f32.mxu0 0.0
    %509 = vmatmul.mubr.f32.gmra.mrb[0].mxu0 %v320
    %v510 = vpop.f32.mrb[0].mxu0
    %v511 = vadd.f32 %v367, %v510
    %v512 = vpop.f32.mrb[0].mxu0
    %513 = vmatprep.mubr.f32.mxu0 0.0
    %514 = vmatmul.mubr.f32.gmra.mrb[0].mxu0 %v321
    %v515 = vpop.f32.mrb[0].mxu0
    %v516 = vadd.f32 %v372, %v515
    %v517 = vpop.f32.mrb[0].mxu0
    %518 = vmatprep.mubr.f32.mxu0 0.0
    %519 = vmatmul.mubr.f32.gmra.mrb[0].mxu0 %v322
    %v520 = vpop.f32.mrb[0].mxu0
    %v521 = vadd.f32 %v377, %v520
    %v522 = vpop.f32.mrb[0].mxu0
    %523 = vmatprep.mubr.f32.mxu0 0.0
    %524 = vmatmul.mubr.f32.gmra.mrb[0].mxu0 %v323
    %v525 = vpop.f32.mrb[0].mxu0
    %v526 = vadd.f32 %v382, %v525
    %v527 = vpop.f32.mrb[0].mxu0
    %528 = vmatprep.mubr.f32.mxu0 0.0
    %529 = vmatmul.mubr.f32.gmra.mrb[0].mxu0 %v324
    %v530 = vpop.f32.mrb[0].mxu0
    %v531 = vadd.f32 %v387, %v530
    %v532 = vpop.f32.mrb[0].mxu0
    %533 = vmatprep.mubr.f32.mxu0 0.0
    %534 = vmatmul.mubr.f32.gmra.mrb[0].mxu0 %v325
    %v535 = vpop.f32.mrb[0].mxu0
    %v536 = vadd.f32 %v392, %v535
    %v537 = vpop.f32.mrb[0].mxu0
    %538 = vmatprep.mubr.f32.mxu0 0.0
    %539 = vmatmul.mubr.f32.gmra.mrb[0].mxu0 %v326
    %v540 = vpop.f32.mrb[0].mxu0
    %v541 = vadd.f32 %v397, %v540
    %v542 = vpop.f32.mrb[0].mxu0
    %543 = vmatprep.mubr.f32.mxu0 0.0
    %544 = vmatmul.mubr.f32.gmra.mrb[0].mxu0 %v327
    %v545 = vpop.f32.mrb[0].mxu0
    %v546 = vadd.f32 %v402, %v545
    %v547 = vpop.f32.mrb[0].mxu0
    %548 = vmatprep.mubr.f32.mxu0 0.0
    %549 = vmatmul.mubr.f32.gmra.mrb[0].mxu0 %v328
    %v550 = vpop.f32.mrb[0].mxu0
    %v551 = vadd.f32 %v407, %v550
    %v552 = vpop.f32.mrb[0].mxu0
    %553 = vmatprep.mubr.f32.mxu0 0.0
    %554 = vmatmul.mubr.f32.gmra.mrb[0].mxu0 %v329
    %v555 = vpop.f32.mrb[0].mxu0
    %v556 = vadd.f32 %v412, %v555
    %v557 = vpop.f32.mrb[0].mxu0
    %558 = vmatprep.mubr.f32.mxu0 0.0
    %559 = vmatmul.mubr.f32.gmra.mrb[0].mxu0 %v330
    %v560 = vpop.f32.mrb[0].mxu0
    %v561 = vadd.f32 %v417, %v560
    %v562 = vpop.f32.mrb[0].mxu0
    %563 = vmatprep.mubr.f32.mxu0 0.0
    %564 = vmatmul.mubr.f32.gmra.mrb[0].mxu0 %v331
    %v565 = vpop.f32.mrb[0].mxu0
    %v566 = vadd.f32 %v422, %v565
    %v567 = vpop.f32.mrb[0].mxu0
    %568 = vmatprep.mubr.f32.mxu0 0.0
    %569 = vmatmul.mubr.f32.gmra.mrb[0].mxu0 %v332
    %v570 = vpop.f32.mrb[0].mxu0
    %v571 = vadd.f32 %v427, %v570
    %v572 = vpop.f32.mrb[0].mxu0
    %573 = vdwg.mxu0
    %v574 = vmax.f32 %v496, 0.0
    %v575 = vmax.f32 %v501, 0.0
    %v576 = vmax.f32 %v506, 0.0
    %v577 = vmax.f32 %v511, 0.0
    %v578 = vmax.f32 %v516, 0.0
    %v579 = vmax.f32 %v521, 0.0
    %v580 = vmax.f32 %v526, 0.0
    %v581 = vmax.f32 %v531, 0.0
    %v582 = vmax.f32 %v536, 0.0
    %v583 = vmax.f32 %v541, 0.0
    %v584 = vmax.f32 %v546, 0.0
    %v585 = vmax.f32 %v551, 0.0
    %v586 = vmax.f32 %v556, 0.0
    %v587 = vmax.f32 %v561, 0.0
    %v588 = vmax.f32 %v566, 0.0
    %v589 = vmax.f32 %v571, 0.0
    %v590 = vld [vmem:[%s5] sm:$0xff]
    %v591 = vld [vmem:[%s5 + $0x8] sm:$0xff]
    %v592 = vld [vmem:[%s5 + $0x10] sm:$0xff]
    %v593 = vld [vmem:[%s5 + $0x18] sm:$0xff]
    %v594 = vld [vmem:[%s5 + $0x20] sm:$0xff]
    %v595 = vld [vmem:[%s5 + $0x28] sm:$0xff]
    %v596 = vld [vmem:[%s5 + $0x30] sm:$0xff]
    %v597 = vld [vmem:[%s5 + $0x38] sm:$0xff]
    %v598 = vld [vmem:[%s5 + $0x40] sm:$0xff]
    %v599 = vld [vmem:[%s5 + $0x48] sm:$0xff]
    %v600 = vld [vmem:[%s5 + $0x50] sm:$0xff]
    %v601 = vld [vmem:[%s5 + $0x58] sm:$0xff]
    %v602 = vld [vmem:[%s5 + $0x60] sm:$0xff]
    %v603 = vld [vmem:[%s5 + $0x68] sm:$0xff]
    %v604 = vld [vmem:[%s5 + $0x70] sm:$0xff]
    %v605 = vld [vmem:[%s5 + $0x78] sm:$0xff]
    %607 = vset.pattern.permute.xlu0 0
    %608 = vperm.xlu0 %607, %v590
    %v609 = vpop.permute.xlu0 %608
    %612 = vset.pattern.permute.xlu0 0
    %613 = vperm.xlu0 %612, %v591
    %v614 = vpop.permute.xlu0 %613
    %617 = vset.pattern.permute.xlu0 0
    %618 = vperm.xlu0 %617, %v592
    %v619 = vpop.permute.xlu0 %618
    %622 = vset.pattern.permute.xlu0 0
    %623 = vperm.xlu0 %622, %v593
    %v624 = vpop.permute.xlu0 %623
    %627 = vset.pattern.permute.xlu0 0
    %628 = vperm.xlu0 %627, %v594
    %v629 = vpop.permute.xlu0 %628
    %632 = vset.pattern.permute.xlu0 0
    %633 = vperm.xlu0 %632, %v595
    %v634 = vpop.permute.xlu0 %633
    %637 = vset.pattern.permute.xlu0 0
    %638 = vperm.xlu0 %637, %v596
    %v639 = vpop.permute.xlu0 %638
    %642 = vset.pattern.permute.xlu0 0
    %643 = vperm.xlu0 %642, %v597
    %v644 = vpop.permute.xlu0 %643
    %647 = vset.pattern.permute.xlu0 0
    %648 = vperm.xlu0 %647, %v598
    %v649 = vpop.permute.xlu0 %648
    %652 = vset.pattern.permute.xlu0 0
    %653 = vperm.xlu0 %652, %v599
    %v654 = vpop.permute.xlu0 %653
    %657 = vset.pattern.permute.xlu0 0
    %658 = vperm.xlu0 %657, %v600
    %v659 = vpop.permute.xlu0 %658
    %662 = vset.pattern.permute.xlu0 0
    %663 = vperm.xlu0 %662, %v601
    %v664 = vpop.permute.xlu0 %663
    %667 = vset.pattern.permute.xlu0 0
    %668 = vperm.xlu0 %667, %v602
    %v669 = vpop.permute.xlu0 %668
    %672 = vset.pattern.permute.xlu0 0
    %673 = vperm.xlu0 %672, %v603
    %v674 = vpop.permute.xlu0 %673
    %677 = vset.pattern.permute.xlu0 0
    %678 = vperm.xlu0 %677, %v604
    %v679 = vpop.permute.xlu0 %678
    %682 = vset.pattern.permute.xlu0 0
    %683 = vperm.xlu0 %682, %v605
    %v684 = vpop.permute.xlu0 %683
    %v686 = vmul.f32 %v609, %v574
    %v687 = vmul.f32 %v614, %v575
    %v688 = vmul.f32 %v619, %v576
    %v689 = vmul.f32 %v624, %v577
    %v690 = vmul.f32 %v629, %v578
    %v691 = vmul.f32 %v634, %v579
    %v692 = vmul.f32 %v639, %v580
    %v693 = vmul.f32 %v644, %v581
    %v694 = vmul.f32 %v649, %v582
    %v695 = vmul.f32 %v654, %v583
    %v696 = vmul.f32 %v659, %v584
    %v697 = vmul.f32 %v664, %v585
    %v698 = vmul.f32 %v669, %v586
    %v699 = vmul.f32 %v674, %v587
    %v700 = vmul.f32 %v679, %v588
    %v701 = vmul.f32 %v684, %v589
    %v702 = vadd.f32 %v686, %v687
    %v703 = vadd.f32 %v702, %v688
    %v704 = vadd.f32 %v703, %v689
    %v705 = vadd.f32 %v704, %v690
    %v706 = vadd.f32 %v705, %v691
    %v707 = vadd.f32 %v706, %v692
    %v708 = vadd.f32 %v707, %v693
    %v709 = vadd.f32 %v708, %v694
    %v710 = vadd.f32 %v709, %v695
    %v711 = vadd.f32 %v710, %v696
    %v712 = vadd.f32 %v711, %v697
    %v713 = vadd.f32 %v712, %v698
    %v714 = vadd.f32 %v713, %v699
    %v715 = vadd.f32 %v714, %v700
    %v716 = vadd.f32 %v715, %v701
    %v717 = vrot.slane %v716, 4
    %v718 = vadd.f32 %v716, %v717
    %v719 = vrot.slane %v718, 2
    %v720 = vadd.f32 %v718, %v719
    %v721 = vrot.slane %v720, 1
    %v722 = vadd.f32 %v720, %v721
    %s723 = sld [smem:[#allocation2]]
    %v724 = vstv %s723
    %v725 = vadd.f32 %v722, %v724
    %726 = vst [vmem:[#allocation3] sm:$0x1] %v725
    // Predicated region
    $region30: #{tpu_custom_call.1} parent=1 // pred_check
      _
    $region31: #{tpu_custom_call.1} parent=1 // pred_check_branch
      %728 = sbr.rel (0) target = $region33
    $region32: #{tpu_custom_call.1} parent=1 // pred_region
      %s730 = ssub.s32 16, 16
      %731 = vsyncadd [#allocation4], %s730
      %s733 = sshll.u32 [#allocation3], 4
      %s734 = int_to_ptr.vmem [resolvable:$true] %s733
      %736 = dma.vmem_to_hbm [thread:$0]  %s734, 16, %s7, [#allocation4]
    $region33: #{tpu_custom_call.1} parent=1 // pred_fallthru
      _
    // Predicated region
    $region34: #{tpu_custom_call.1} parent=1 // pred_check
      _
    $region35: #{tpu_custom_call.1} parent=1 // pred_check_branch
      %738 = sbr.rel (0) target = $region37
    $region36: #{tpu_custom_call.1} parent=1 // pred_region
      %739 = dma.done [#allocation4], 16
    $region37: #{tpu_custom_call.1} parent=1 // pred_fallthru
      _
    %740 = vsyncpa [#allocation4], 1

</llo_original>
